<compile_context>
chip_gen: v5e
topology: v5e:2x2
jax: 0.10.0
libtpu: 0.0.40
codegen_flags: <defaults>
</compile_context>

<pallas_src>
import math
from functools import partial

import jax
import jax.numpy as jnp
from jax import lax
from jax.experimental import pallas as pl
from jax.experimental.pallas import tpu as pltpu

_BN_EPS = 1e-5
FC_PAD = 128                    # padded fc output width (lane-dense store)
HEADS = ("extr", "size", "perspect")


# ----------------------------------------------------------------------------
# Fused single-invocation kernel (empty grid): all three heads at once.
# ----------------------------------------------------------------------------
def estimator_kernel(x_ref, w1_ref, b1_ref, w2_ref, b2_ref, wfc_ref, bfc_ref,
                     out_ref, *, size_range, perspect_range):
    x = x_ref[...]                                   # [B, C]  f32 (residual)
    xb = x.astype(jnp.bfloat16)

    # Stage 1 (all heads): [B, C] @ [C, 3C]  (linear1 + folded BN1) + ReLU
    h1 = jnp.dot(xb, w1_ref[...], preferred_element_type=jnp.float32) + b1_ref[...]
    h1 = jnp.maximum(h1, 0.0)

    # Stage 2 (all heads): [B, 3C] @ [3C, 3C] block-diagonal (linear2 + BN2),
    # + per-head residual (feat) + ReLU.  Off-diagonal blocks are exactly zero.
    x3 = jnp.concatenate([x, x, x], axis=-1)
    h2 = jnp.dot(h1.astype(jnp.bfloat16), w2_ref[...],
                 preferred_element_type=jnp.float32) + b2_ref[...] + x3
    h2 = jnp.maximum(h2, 0.0)

    # Packed fcs (all heads): [B, 3C] @ [3C, 128]
    #   lanes 0-5 <- extr_fc(h2_extr), lane 6 <- size_fc(h2_size),
    #   lane 7 <- perspect_fc(h2_perspect), lanes 8..127 zero.
    y = jnp.dot(h2.astype(jnp.bfloat16), wfc_ref[...],
                preferred_element_type=jnp.float32) + bfc_ref[...]

    n = y.shape[-1]
    lane = lax.broadcasted_iota(jnp.int32, y.shape, 1)
    is_even = (lane & 1) == 0

    def pair_swap(v):
        # swap lanes within each (2k, 2k+1) pair — XLU rolls + one VALU select
        fwd = pltpu.roll(v, shift=1, axis=1)         # fwd[:, i] = v[:, i-1]
        bwd = pltpu.roll(v, shift=n - 1, axis=1)     # bwd[:, i] = v[:, i+1]
        return jnp.where(is_even, bwd, fwd)

    # Pairwise L2 normalize == torch.F.normalize(dim=1, p=2, eps=1e-12) on each
    # (2k, 2k+1) column pair:  rsqrt(max(n2, 1e-24)) == 1 / max(||pair||, 1e-12).
    y2 = y * y
    n2 = y2 + pair_swap(y2)
    norm_vals = y * lax.rsqrt(jnp.maximum(n2, 1e-24))

    # Scale heads: 1 + tanh(y) * range on lane 6 (size) and lane 7 (perspect).
    range_vec = jnp.where(lane == 6, size_range,
                          jnp.where(lane == 7, perspect_range, 0.0)
                          ).astype(jnp.float32)
    scale = 1.0 + jnp.tanh(y) * range_vec
    scale_sw = pair_swap(scale)                      # lane6<-perspect, lane7<-size
    #   lane 6: scale_focal = scale_perspect
    #   lane 7: scale_dist  = scale_size * scale_perspect
    scale_out = jnp.where(lane == 7, scale * scale_sw, scale_sw)

    out_ref[...] = jnp.where(lane < 6, norm_vals,
                             jnp.where(lane < 8, scale_out, 0.0))


def run_estimator_kernel(feat, packed, size_range, perspect_range):
    B, C = feat.shape
    w1c, b1c, w2b, b2c, wfc, bfc = packed

    flops = (2 * B * C * 3 * C) + (2 * B * 3 * C * 3 * C) + (2 * B * 3 * C * FC_PAD)
    transcendentals = 2 * B * FC_PAD                 # tanh + rsqrt
    bytes_accessed = (4 * B * C
                      + 2 * (3 * C * C + 9 * C * C + 3 * C * FC_PAD)  # bf16 weights
                      + 4 * (6 * C + FC_PAD)                          # f32 biases
                      + 4 * B * FC_PAD)                               # f32 output

    vmem = pl.BlockSpec(memory_space=pltpu.MemorySpace.VMEM)
    return pl.pallas_call(
        partial(estimator_kernel,
                size_range=float(size_range),
                perspect_range=float(perspect_range)),
        out_shape=jax.ShapeDtypeStruct((B, FC_PAD), jnp.float32),
        in_specs=[vmem] * 7,
        out_specs=vmem,
        cost_estimate=pl.CostEstimate(flops=flops,
                                      transcendentals=transcendentals,
                                      bytes_accessed=bytes_accessed),
    )(feat, w1c, b1c, w2b, b2c, wfc, bfc)


# ----------------------------------------------------------------------------
# Parameter construction (mirrors Estimator.__init__ / Bottleneck_Linear)
# ----------------------------------------------------------------------------
def make_bottleneck_params(key, C, zero_init=True, randomize=False):
    """Bottleneck_Linear(C) with eval-mode BatchNorm folded into weight/bias."""
    ks = jax.random.split(key, 10)
    bound = 1.0 / math.sqrt(C)
    w1 = jax.random.uniform(ks[0], (C, C), jnp.float32, -bound, bound)  # [out, in]
    w2 = jax.random.uniform(ks[1], (C, C), jnp.float32, -bound, bound)
    if randomize:    # non-degenerate BN affine/stats (validation only)
        g1 = jax.random.uniform(ks[2], (C,), jnp.float32, 0.5, 1.5)
        beta1 = jax.random.uniform(ks[3], (C,), jnp.float32, -0.3, 0.3)
        m1 = jax.random.uniform(ks[4], (C,), jnp.float32, -0.3, 0.3)
        v1 = jax.random.uniform(ks[5], (C,), jnp.float32, 0.5, 1.5)
        g2 = jax.random.uniform(ks[6], (C,), jnp.float32, 0.5, 1.5)
        beta2 = jax.random.uniform(ks[7], (C,), jnp.float32, -0.3, 0.3)
        m2 = jax.random.uniform(ks[8], (C,), jnp.float32, -0.3, 0.3)
        v2 = jax.random.uniform(ks[9], (C,), jnp.float32, 0.5, 1.5)
    else:            # torch defaults at __init__ (eval mode), zero_init on BN2
        g1 = jnp.ones((C,), jnp.float32)
        beta1 = jnp.zeros((C,), jnp.float32)
        m1 = jnp.zeros((C,), jnp.float32)
        v1 = jnp.ones((C,), jnp.float32)
        g2 = (jnp.zeros if zero_init else jnp.ones)((C,), jnp.float32)
        beta2 = jnp.zeros((C,), jnp.float32)
        m2 = jnp.zeros((C,), jnp.float32)
        v2 = jnp.ones((C,), jnp.float32)
    s1 = g1 / jnp.sqrt(v1 + _BN_EPS)
    s2 = g2 / jnp.sqrt(v2 + _BN_EPS)
    w1_eff, b1_eff = w1 * s1[:, None], beta1 - s1 * m1
    w2_eff, b2_eff = w2 * s2[:, None], beta2 - s2 * m2
    return w1_eff.T, b1_eff[None, :], w2_eff.T, b2_eff[None, :]  # [Cin,Cout],[1,C]


def make_fc_params(key, C, out_features, kind, randomize=False):
    """nn.Linear(C, out_features) with Estimator.__init__'s constant_ overrides."""
    kw, kb = jax.random.split(key)
    bound = 1.0 / math.sqrt(C)
    w = jax.random.uniform(kw, (out_features, C), jnp.float32, -bound, bound)
    b = jax.random.uniform(kb, (out_features,), jnp.float32, -bound, bound)
    if not randomize:
        if kind == "extr":
            w = w.at[2:, :].set(0.0)
            b = b.at[2].set(1.0).at[3].set(0.0).at[4].set(1.0).at[5].set(0.0)
        else:            # size / perspect fcs are zero-initialized
            w, b = jnp.zeros_like(w), jnp.zeros_like(b)
    return w, b


def make_params(key, C, randomize=False):
    k = jax.random.split(key, 6)
    return {
        "extr_head": make_bottleneck_params(k[0], C, randomize=randomize),
        "size_head": make_bottleneck_params(k[1], C, randomize=randomize),
        "perspect_head": make_bottleneck_params(k[2], C, randomize=randomize),
        "extr_fc": make_fc_params(k[3], C, 6, "extr", randomize=randomize),
        "size_fc": make_fc_params(k[4], C, 1, "size", randomize=randomize),
        "perspect_fc": make_fc_params(k[5], C, 1, "perspect", randomize=randomize),
    }


def pack_params(params, C, pad=FC_PAD):
    """Concatenate the three heads along the lane axis; matmul weights -> bf16."""
    w1_cat = jnp.concatenate([params[h + "_head"][0] for h in HEADS], axis=1)
    b1_cat = jnp.concatenate([params[h + "_head"][1] for h in HEADS], axis=1)
    b2_cat = jnp.concatenate([params[h + "_head"][3] for h in HEADS], axis=1)
    w2_blk = jnp.zeros((3 * C, 3 * C), jnp.float32)
    for i, h in enumerate(HEADS):
        w2_blk = w2_blk.at[i * C:(i + 1) * C, i * C:(i + 1) * C].set(
            params[h + "_head"][2])

    we, be = params["extr_fc"]          # [6, C], [6]
    ws, bs = params["size_fc"]          # [1, C], [1]
    wp, bp = params["perspect_fc"]      # [1, C], [1]
    wfc = jnp.zeros((3 * C, pad), jnp.float32)
    wfc = wfc.at[0:C, 0:6].set(we.T)
    wfc = wfc.at[C:2 * C, 6].set(ws[0])
    wfc = wfc.at[2 * C:3 * C, 7].set(wp[0])
    bfc = jnp.zeros((1, pad), jnp.float32)
    bfc = bfc.at[0, 0:6].set(be).at[0, 6].set(bs[0]).at[0, 7].set(bp[0])

    return (w1_cat.astype(jnp.bfloat16), b1_cat,
            w2_blk.astype(jnp.bfloat16), b2_cat,
            wfc.astype(jnp.bfloat16), bfc)


# ----------------------------------------------------------------------------
# Full forward (post-backbone) + pure-JAX reference for validation
# ----------------------------------------------------------------------------
def estimator_forward(feat, packed, size_range, perspect_range):
    out = run_estimator_kernel(feat, packed, size_range, perspect_range)
    output_a = out[:, 0:2]
    output_e = out[:, 2:4]
    output_t = out[:, 4:6]
    scale_focal = out[:, 6]
    scale_dist = out[:, 7]
    return output_a, output_e, output_t, scale_focal, scale_dist


def estimator_forward_ref(feat, params, size_range, perspect_range):
    """Pure-JAX reference with the same bf16-matmul / f32-accumulate math."""
    def bottleneck(p):
        w1t, b1, w2t, b2 = p
        h1 = jnp.maximum(
            jnp.dot(feat.astype(jnp.bfloat16), w1t.astype(jnp.bfloat16),
                    preferred_element_type=jnp.float32) + b1, 0.0)
        return jnp.maximum(
            feat + jnp.dot(h1.astype(jnp.bfloat16), w2t.astype(jnp.bfloat16),
                           preferred_element_type=jnp.float32) + b2, 0.0)

    def fc(h, wb):
        w, b = wb
        return jnp.dot(h.astype(jnp.bfloat16), w.T.astype(jnp.bfloat16),
                       preferred_element_type=jnp.float32) + b

    def nrm(v):  # torch.nn.functional.normalize(dim=1, p=2, eps=1e-12)
        return v / jnp.maximum(jnp.linalg.norm(v, axis=1, keepdims=True), 1e-12)

    y = fc(bottleneck(params["extr_head"]), params["extr_fc"])
    a, e, t = nrm(y[:, 0:2]), nrm(y[:, 2:4]), nrm(y[:, 4:6])
    ss = 1.0 + jnp.tanh(fc(bottleneck(params["size_head"]),
                           params["size_fc"]))[:, 0] * size_range
    sp = 1.0 + jnp.tanh(fc(bottleneck(params["perspect_head"]),
                           params["perspect_fc"]))[:, 0] * perspect_range
    return a, e, t, sp, ss * sp


# ----------------------------------------------------------------------------
if __name__ == "__main__":
    B, C = 8, 128                    # small n_features stand-in for resnet18's 512
    size_range, perspect_range = 0.2, 0.1

    root = jax.random.PRNGKey(0)
    k_feat, k_init, k_rand = jax.random.split(root, 3)

    # Stand-in for resnet18 pooled features (post-ReLU => nonnegative).
    feat = jnp.abs(jax.random.normal(k_feat, (B, C), jnp.float32))

    # Validate BOTH the spec-faithful init (zero_init BN2, zeroed scale fcs)
    # and a fully randomized non-degenerate parameter set.
    for key, randomize in ((k_init, False), (k_rand, True)):
        params = make_params(key, C, randomize=randomize)
        packed = pack_params(params, C)

        outs = jax.block_until_ready(
            estimator_forward(feat, packed, size_range, perspect_range))
        refs = estimator_forward_ref(feat, params, size_range, perspect_range)

        for o, r in zip(outs, refs):
            assert o.shape == r.shape and o.dtype == r.dtype
            assert float(jnp.max(jnp.abs(o - r))) < 5e-3, \
                f"mismatch vs. pure-JAX reference (randomize={randomize})"

    print("KERNEL_OK")
</pallas_src>

<mosaic_0001>
module attributes {stable_mosaic.version = 11 : i64} {
  func.func @estimator_kernel(%arg0: memref<8x128xf32, #tpu.memory_space<vmem>>, %arg1: memref<128x384xbf16, #tpu.memory_space<vmem>>, %arg2: memref<1x384xf32, #tpu.memory_space<vmem>>, %arg3: memref<384x384xbf16, #tpu.memory_space<vmem>>, %arg4: memref<1x384xf32, #tpu.memory_space<vmem>>, %arg5: memref<384x128xbf16, #tpu.memory_space<vmem>>, %arg6: memref<1x128xf32, #tpu.memory_space<vmem>>, %arg7: memref<8x128xf32, #tpu.memory_space<vmem>>) attributes {dimension_semantics = [], scalar_prefetch = 0 : i64, scratch_operands = 0 : i64, tpu.core_type = #tpu.core_type<tc>} {
    %c0 = arith.constant 0 : index
    %c0_0 = arith.constant 0 : index
    %0 = vector.load %arg0[%c0, %c0_0] : memref<8x128xf32, #tpu.memory_space<vmem>>, vector<8x128xf32>
    %1 = arith.truncf %0 : vector<8x128xf32> to vector<8x128xbf16>
    %c0_1 = arith.constant 0 : index
    %c0_2 = arith.constant 0 : index
    %2 = vector.load %arg1[%c0_1, %c0_2] : memref<128x384xbf16, #tpu.memory_space<vmem>>, vector<128x384xbf16>
    %cst = arith.constant dense<0.000000e+00> : vector<8x384xf32>
    %3 = tpu.matmul %1, %2, %cst {dimension_numbers = #tpu.dot_dimension_numbers<[1], [0], [0], [1], [0, 0, 1, 1], [], []>} : vector<8x128xbf16>, vector<128x384xbf16>, vector<8x384xf32> -> vector<8x384xf32>
    %c0_3 = arith.constant 0 : index
    %c0_4 = arith.constant 0 : index
    %4 = vector.load %arg2[%c0_3, %c0_4] : memref<1x384xf32, #tpu.memory_space<vmem>>, vector<1x384xf32>
    %5 = vector.broadcast %4 : vector<1x384xf32> to vector<8x384xf32>
    %6 = arith.addf %3, %5 : vector<8x384xf32>
    %cst_5 = arith.constant 0.000000e+00 : f32
    %7 = vector.broadcast %cst_5 : f32 to vector<8x384xf32>
    %8 = arith.maximumf %6, %7 : vector<8x384xf32>
    %9 = tpu.concatenate %0, %0, %0 in 1 : vector<8x128xf32>, vector<8x128xf32>, vector<8x128xf32> -> vector<8x384xf32>
    %10 = arith.truncf %8 : vector<8x384xf32> to vector<8x384xbf16>
    %c0_6 = arith.constant 0 : index
    %c0_7 = arith.constant 0 : index
    %11 = vector.load %arg3[%c0_6, %c0_7] : memref<384x384xbf16, #tpu.memory_space<vmem>>, vector<384x384xbf16>
    %cst_8 = arith.constant dense<0.000000e+00> : vector<8x384xf32>
    %12 = tpu.matmul %10, %11, %cst_8 {dimension_numbers = #tpu.dot_dimension_numbers<[1], [0], [0], [1], [0, 0, 1, 1], [], []>} : vector<8x384xbf16>, vector<384x384xbf16>, vector<8x384xf32> -> vector<8x384xf32>
    %c0_9 = arith.constant 0 : index
    %c0_10 = arith.constant 0 : index
    %13 = vector.load %arg4[%c0_9, %c0_10] : memref<1x384xf32, #tpu.memory_space<vmem>>, vector<1x384xf32>
    %14 = vector.broadcast %13 : vector<1x384xf32> to vector<8x384xf32>
    %15 = arith.addf %12, %14 : vector<8x384xf32>
    %16 = arith.addf %15, %9 : vector<8x384xf32>
    %cst_11 = arith.constant 0.000000e+00 : f32
    %17 = vector.broadcast %cst_11 : f32 to vector<8x384xf32>
    %18 = arith.maximumf %16, %17 : vector<8x384xf32>
    %19 = arith.truncf %18 : vector<8x384xf32> to vector<8x384xbf16>
    %c0_12 = arith.constant 0 : index
    %c0_13 = arith.constant 0 : index
    %20 = vector.load %arg5[%c0_12, %c0_13] : memref<384x128xbf16, #tpu.memory_space<vmem>>, vector<384x128xbf16>
    %cst_14 = arith.constant dense<0.000000e+00> : vector<8x128xf32>
    %21 = tpu.matmul %19, %20, %cst_14 {dimension_numbers = #tpu.dot_dimension_numbers<[1], [0], [0], [1], [0, 0, 1, 1], [], []>} : vector<8x384xbf16>, vector<384x128xbf16>, vector<8x128xf32> -> vector<8x128xf32>
    %c0_15 = arith.constant 0 : index
    %c0_16 = arith.constant 0 : index
    %22 = vector.load %arg6[%c0_15, %c0_16] : memref<1x128xf32, #tpu.memory_space<vmem>>, vector<1x128xf32>
    %23 = vector.broadcast %22 : vector<1x128xf32> to vector<8x128xf32>
    %24 = arith.addf %21, %23 : vector<8x128xf32>
    %25 = tpu.iota {dimensions = array<i32: 1>} : vector<8x128xi32>
    %c1_i32 = arith.constant 1 : i32
    %26 = vector.broadcast %c1_i32 : i32 to vector<8x128xi32>
    %27 = arith.andi %25, %26 : vector<8x128xi32>
    %c0_i32 = arith.constant 0 : i32
    %28 = vector.broadcast %c0_i32 : i32 to vector<8x128xi32>
    %29 = arith.cmpi eq, %27, %28 : vector<8x128xi32>
    %30 = arith.mulf %24, %24 : vector<8x128xf32>
    %c1_i32_17 = arith.constant 1 : i32
    %31 = tpu.dynamic_rotate %30 by %c1_i32_17 dim 1 : vector<8x128xf32>, i32 -> vector<8x128xf32>
    %c127_i32 = arith.constant 127 : i32
    %32 = tpu.dynamic_rotate %30 by %c127_i32 dim 1 : vector<8x128xf32>, i32 -> vector<8x128xf32>
    %33 = arith.select %29, %32, %31 : vector<8x128xi1>, vector<8x128xf32>
    %34 = arith.addf %30, %33 : vector<8x128xf32>
    %cst_18 = arith.constant 1.000000e-24 : f32
    %35 = vector.broadcast %cst_18 : f32 to vector<8x128xf32>
    %36 = arith.maximumf %34, %35 : vector<8x128xf32>
    %37 = math.rsqrt %36 : vector<8x128xf32>
    %38 = arith.mulf %24, %37 : vector<8x128xf32>
    %c6_i32 = arith.constant 6 : i32
    %39 = vector.broadcast %c6_i32 : i32 to vector<8x128xi32>
    %40 = arith.cmpi eq, %25, %39 : vector<8x128xi32>
    %c7_i32 = arith.constant 7 : i32
    %41 = vector.broadcast %c7_i32 : i32 to vector<8x128xi32>
    %42 = arith.cmpi eq, %25, %41 : vector<8x128xi32>
    %cst_19 = arith.constant 1.000000e-01 : f32
    %cst_20 = arith.constant 0.000000e+00 : f32
    %43 = vector.broadcast %cst_19 : f32 to vector<8x128xf32>
    %44 = vector.broadcast %cst_20 : f32 to vector<8x128xf32>
    %45 = arith.select %42, %43, %44 : vector<8x128xi1>, vector<8x128xf32>
    %cst_21 = arith.constant 2.000000e-01 : f32
    %46 = vector.broadcast %cst_21 : f32 to vector<8x128xf32>
    %47 = arith.select %40, %46, %45 : vector<8x128xi1>, vector<8x128xf32>
    %48 = math.tanh %24 : vector<8x128xf32>
    %49 = arith.mulf %48, %47 : vector<8x128xf32>
    %cst_22 = arith.constant 1.000000e+00 : f32
    %50 = vector.broadcast %cst_22 : f32 to vector<8x128xf32>
    %51 = arith.addf %50, %49 : vector<8x128xf32>
    %c1_i32_23 = arith.constant 1 : i32
    %52 = tpu.dynamic_rotate %51 by %c1_i32_23 dim 1 : vector<8x128xf32>, i32 -> vector<8x128xf32>
    %c127_i32_24 = arith.constant 127 : i32
    %53 = tpu.dynamic_rotate %51 by %c127_i32_24 dim 1 : vector<8x128xf32>, i32 -> vector<8x128xf32>
    %54 = arith.select %29, %53, %52 : vector<8x128xi1>, vector<8x128xf32>
    %c7_i32_25 = arith.constant 7 : i32
    %55 = vector.broadcast %c7_i32_25 : i32 to vector<8x128xi32>
    %56 = arith.cmpi eq, %25, %55 : vector<8x128xi32>
    %57 = arith.mulf %51, %54 : vector<8x128xf32>
    %58 = arith.select %56, %57, %54 : vector<8x128xi1>, vector<8x128xf32>
    %c6_i32_26 = arith.constant 6 : i32
    %59 = vector.broadcast %c6_i32_26 : i32 to vector<8x128xi32>
    %60 = arith.cmpi slt, %25, %59 : vector<8x128xi32>
    %c8_i32 = arith.constant 8 : i32
    %61 = vector.broadcast %c8_i32 : i32 to vector<8x128xi32>
    %62 = arith.cmpi slt, %25, %61 : vector<8x128xi32>
    %cst_27 = arith.constant 0.000000e+00 : f32
    %63 = vector.broadcast %cst_27 : f32 to vector<8x128xf32>
    %64 = arith.select %62, %58, %63 : vector<8x128xi1>, vector<8x128xf32>
    %65 = arith.select %60, %38, %64 : vector<8x128xi1>, vector<8x128xf32>
    %c0_28 = arith.constant 0 : index
    %c0_29 = arith.constant 0 : index
    %66 = vector.load %arg7[%c0_28, %c0_29] : memref<8x128xf32, #tpu.memory_space<vmem>>, vector<8x128xf32>
    tpu.vector_store %arg7[%c0_28, %c0_29], %65 {strides = array<i32>} : memref<8x128xf32, #tpu.memory_space<vmem>>, vector<8x128xf32>,
    return
  }
}

</mosaic_0001>

<llo_original>
// kernel: tpu_custom_call.1
$region0: #{tpu_custom_call.1}
  #allocation0 [shape = 'u32[]', space=smem, size = 0x4, offset = 0x4, fixed_abs, tag = 'smem constant byte address 0x4 - core index']
  #allocation1 [shape = 'u32[72,128]{1,0:T(1,128)}', space=vmem, size = 0x9000, scoped, tag = 'internal scratch']
  %s0 = inlined_call_operand.hbm [shape: f32[8,128], index: 0, kind: input, shape index: {}]
  %s1 = inlined_call_operand.hbm [shape: bf16[128,384], index: 1, kind: input, shape index: {}]
  %s2 = inlined_call_operand.hbm [shape: f32[1,384], index: 2, kind: input, shape index: {}]
  %s3 = inlined_call_operand.hbm [shape: bf16[384,384], index: 3, kind: input, shape index: {}]
  %s4 = inlined_call_operand.vmem [shape: f32[1,384], index: 4, kind: input, shape index: {}]
  %s5 = inlined_call_operand.hbm [shape: bf16[384,128], index: 5, kind: input, shape index: {}]
  %s6 = inlined_call_operand.vmem [shape: f32[1,128], index: 6, kind: input, shape index: {}]
  %s7 = inlined_call_operand.hbm [shape: f32[8,128], index: 7, kind: output, shape index: {}]
  %s8 = sld [smem:[#allocation0]]
  $region58: #{tpu_custom_call.1} parent=0
    _
  %s10 = ssub.s32 1, %s8
  %s11 = scalar_select 0, %s10, %s8
  $region1: #{tpu_custom_call.1} parent=0
    #allocation2 [shape = 'u8[4096]{0}', space=vmem, size = 0x1000, scoped, tag = 'input window, operand 0, single buffered']
    #allocation3 [shape = 's32[1]{0}', space=sflag, size = 0x4, scoped, tag = 'scoped memory for tpu_custom_call.1']
    #allocation4 [shape = 's32[1]{0}', space=sflag, size = 0x4, scoped, tag = 'scoped memory for tpu_custom_call.1']
    #allocation5 [shape = 'u8[98304]{0}', space=vmem, size = 0x18000, scoped, tag = 'input window, operand 1, single buffered']
    #allocation6 [shape = 's32[1]{0}', space=sflag, size = 0x4, scoped, tag = 'scoped memory for tpu_custom_call.1']
    #allocation7 [shape = 'u8[1536]{0}', space=vmem, size = 0x800, scoped, tag = 'input window, operand 2, single buffered']
    #allocation8 [shape = 'u8[294912]{0}', space=vmem, size = 0x48000, scoped, tag = 'input window, operand 3, single buffered']
    #allocation9 [shape = 's32[1]{0}', space=sflag, size = 0x4, scoped, tag = 'scoped memory for tpu_custom_call.1']
    #allocation10 [shape = 'u8[98304]{0}', space=vmem, size = 0x18000, scoped, tag = 'input window, operand 5, single buffered']
    #allocation11 [shape = 'u8[4096]{0}', space=vmem, size = 0x1000, scoped, tag = 'output window, operand 0, single buffered']
    %12 = vsyncpa [#allocation3], 0
    %13 = vsyncpa [#allocation6], 0
    %14 = vsyncpa [#allocation9], 0
    %15 = vsyncpa [#allocation4], 0
    // Predicated region
    $region2: #{tpu_custom_call.1} parent=1 // pred_check
      _
    $region3: #{tpu_custom_call.1} parent=1 // pred_check_branch
      %17 = sbr.rel (0) target = $region5
    $region4: #{tpu_custom_call.1} parent=1 // pred_region
      %19 = vsyncadd [#allocation3], 0
      %s21 = sshll.u32 %s0, 4
      %s22 = int_to_ptr.hbm [resolvable:$true] %s21
      %s23 = sshll.u32 [#allocation2], 4
      %s24 = int_to_ptr.vmem [resolvable:$true] %s23
      %26 = dma.hbm_to_vmem [thread:$0]  %s22, 128, %s24, [#allocation3]
    $region5: #{tpu_custom_call.1} parent=1 // pred_fallthru
      _
    // Predicated region
    $region6: #{tpu_custom_call.1} parent=1 // pred_check
      _
    $region7: #{tpu_custom_call.1} parent=1 // pred_check_branch
      %28 = sbr.rel (0) target = $region9
    $region8: #{tpu_custom_call.1} parent=1 // pred_region
      %30 = vsyncadd [#allocation6], 0
      %s31 = sshll.u32 %s1, 4
      %s32 = int_to_ptr.hbm [resolvable:$true] %s31
      %s33 = sshll.u32 [#allocation5], 4
      %s34 = int_to_ptr.vmem [resolvable:$true] %s33
      %39 = dma.hbm_to_vmem [thread:$0]  %s32, 3072, %s34, [#allocation6], 192, 192, 12
    $region9: #{tpu_custom_call.1} parent=1 // pred_fallthru
      _
    // Predicated region
    $region10: #{tpu_custom_call.1} parent=1 // pred_check
      _
    $region11: #{tpu_custom_call.1} parent=1 // pred_check_branch
      %41 = sbr.rel (0) target = $region13
    $region12: #{tpu_custom_call.1} parent=1 // pred_region
      %43 = vsyncadd [#allocation6], 0
      %s45 = sshll.u32 %s2, 4
      %s46 = int_to_ptr.hbm [resolvable:$true] %s45
      %s47 = sshll.u32 [#allocation7], 4
      %s48 = int_to_ptr.vmem [resolvable:$true] %s47
      %50 = dma.hbm_to_vmem [thread:$0]  %s46, 48, %s48, [#allocation6]
    $region13: #{tpu_custom_call.1} parent=1 // pred_fallthru
      _
    // Predicated region
    $region14: #{tpu_custom_call.1} parent=1 // pred_check
      _
    $region15: #{tpu_custom_call.1} parent=1 // pred_check_branch
      %52 = sbr.rel (0) target = $region17
    $region16: #{tpu_custom_call.1} parent=1 // pred_region
      %54 = vsyncadd [#allocation9], 0
      %s55 = sshll.u32 %s3, 4
      %s56 = int_to_ptr.hbm [resolvable:$true] %s55
      %s57 = sshll.u32 [#allocation8], 4
      %s58 = int_to_ptr.vmem [resolvable:$true] %s57
      %63 = dma.hbm_to_vmem [thread:$0]  %s56, 9216, %s58, [#allocation9], 192, 192, 12
    $region17: #{tpu_custom_call.1} parent=1 // pred_fallthru
      _
    // Predicated region
    $region18: #{tpu_custom_call.1} parent=1 // pred_check
      _
    $region19: #{tpu_custom_call.1} parent=1 // pred_check_branch
      %65 = sbr.rel (0) target = $region21
    $region20: #{tpu_custom_call.1} parent=1 // pred_region
      _
    $region21: #{tpu_custom_call.1} parent=1 // pred_fallthru
      _
    // Predicated region
    $region22: #{tpu_custom_call.1} parent=1 // pred_check
      _
    $region23: #{tpu_custom_call.1} parent=1 // pred_check_branch
      %67 = sbr.rel (0) target = $region25
    $region24: #{tpu_custom_call.1} parent=1 // pred_region
      %69 = vsyncadd [#allocation9], 0
      %s70 = sshll.u32 %s5, 4
      %s71 = int_to_ptr.hbm [resolvable:$true] %s70
      %s72 = sshll.u32 [#allocation10], 4
      %s73 = int_to_ptr.vmem [resolvable:$true] %s72
      %78 = dma.hbm_to_vmem [thread:$0]  %s71, 3072, %s73, [#allocation9], 64, 64, 4
    $region25: #{tpu_custom_call.1} parent=1 // pred_fallthru
      _
    // Predicated region
    $region26: #{tpu_custom_call.1} parent=1 // pred_check
      _
    $region27: #{tpu_custom_call.1} parent=1 // pred_check_branch
      %80 = sbr.rel (0) target = $region29
    $region28: #{tpu_custom_call.1} parent=1 // pred_region
      _
    $region29: #{tpu_custom_call.1} parent=1 // pred_fallthru
      _
    // Predicated region
    $region30: #{tpu_custom_call.1} parent=1 // pred_check
      _
    $region31: #{tpu_custom_call.1} parent=1 // pred_check_branch
      %82 = sbr.rel (0) target = $region33
    $region32: #{tpu_custom_call.1} parent=1 // pred_region
      %84 = dma.done [#allocation3], 128
    $region33: #{tpu_custom_call.1} parent=1 // pred_fallthru
      _
    // Predicated region
    $region34: #{tpu_custom_call.1} parent=1 // pred_check
      _
    $region35: #{tpu_custom_call.1} parent=1 // pred_check_branch
      %86 = sbr.rel (0) target = $region37
    $region36: #{tpu_custom_call.1} parent=1 // pred_region
      %88 = dma.done [#allocation6], 3072
    $region37: #{tpu_custom_call.1} parent=1 // pred_fallthru
      _
    // Predicated region
    $region38: #{tpu_custom_call.1} parent=1 // pred_check
      _
    $region39: #{tpu_custom_call.1} parent=1 // pred_check_branch
      %90 = sbr.rel (0) target = $region41
    $region40: #{tpu_custom_call.1} parent=1 // pred_region
      %92 = dma.done [#allocation6], 48
    $region41: #{tpu_custom_call.1} parent=1 // pred_fallthru
      _
    // Predicated region
    $region42: #{tpu_custom_call.1} parent=1 // pred_check
      _
    $region43: #{tpu_custom_call.1} parent=1 // pred_check_branch
      %94 = sbr.rel (0) target = $region45
    $region44: #{tpu_custom_call.1} parent=1 // pred_region
      %96 = dma.done [#allocation9], 9216
    $region45: #{tpu_custom_call.1} parent=1 // pred_fallthru
      _
    // Predicated region
    $region46: #{tpu_custom_call.1} parent=1 // pred_check
      _
    $region47: #{tpu_custom_call.1} parent=1 // pred_check_branch
      %98 = sbr.rel (0) target = $region49
    $region48: #{tpu_custom_call.1} parent=1 // pred_region
      %100 = dma.done [#allocation9], 3072
    $region49: #{tpu_custom_call.1} parent=1 // pred_fallthru
      _
    %v101 = vld [vmem:[#allocation2] sm:$0xff]
    %v102 = vpack.c.bf16 %v101, %v101
    %v103 = vld [vmem:[#allocation5] sm:$0xff]
    %v104 = vld [vmem:[#allocation5 + $0x8] sm:$0xf]
    %v105 = vld [vmem:[#allocation5 + $0xc] sm:$0xff]
    %v106 = vld [vmem:[#allocation5 + $0x14] sm:$0xf]
    %v107 = vld [vmem:[#allocation5 + $0x18] sm:$0xff]
    %v108 = vld [vmem:[#allocation5 + $0x20] sm:$0xf]
    %v109 = vld [vmem:[#allocation5 + $0x24] sm:$0xff]
    %v110 = vld [vmem:[#allocation5 + $0x2c] sm:$0xf]
    %v111 = vld [vmem:[#allocation5 + $0x30] sm:$0xff]
    %v112 = vld [vmem:[#allocation5 + $0x38] sm:$0xf]
    %v113 = vld [vmem:[#allocation5 + $0x3c] sm:$0xff]
    %v114 = vld [vmem:[#allocation5 + $0x44] sm:$0xf]
    %v115 = vld [vmem:[#allocation5 + $0x48] sm:$0xff]
    %v116 = vld [vmem:[#allocation5 + $0x50] sm:$0xf]
    %v117 = vld [vmem:[#allocation5 + $0x54] sm:$0xff]
    %v118 = vld [vmem:[#allocation5 + $0x5c] sm:$0xf]
    %v119 = vld [vmem:[#allocation5 + $0x60] sm:$0xff]
    %v120 = vld [vmem:[#allocation5 + $0x68] sm:$0xf]
    %v121 = vld [vmem:[#allocation5 + $0x6c] sm:$0xff]
    %v122 = vld [vmem:[#allocation5 + $0x74] sm:$0xf]
    %v123 = vld [vmem:[#allocation5 + $0x78] sm:$0xff]
    %v124 = vld [vmem:[#allocation5 + $0x80] sm:$0xf]
    %v125 = vld [vmem:[#allocation5 + $0x84] sm:$0xff]
    %v126 = vld [vmem:[#allocation5 + $0x8c] sm:$0xf]
    %v127 = vld [vmem:[#allocation5 + $0x90] sm:$0xff]
    %v128 = vld [vmem:[#allocation5 + $0x98] sm:$0xf]
    %v129 = vld [vmem:[#allocation5 + $0x9c] sm:$0xff]
    %v130 = vld [vmem:[#allocation5 + $0xa4] sm:$0xf]
    %v131 = vld [vmem:[#allocation5 + $0xa8] sm:$0xff]
    %v132 = vld [vmem:[#allocation5 + $0xb0] sm:$0xf]
    %v133 = vld [vmem:[#allocation5 + $0xb4] sm:$0xff]
    %v134 = vld [vmem:[#allocation5 + $0xbc] sm:$0xf]
    %v135 = vld [vmem:[#allocation7] sm:$0x7]
    %v137 = vperm.slane %v135, 0
    %v138 = vperm.slane %v135, 1
    %v139 = vperm.slane %v135, 2
    %v175 = vunpack.c.l.b16 %v103
    %v176 = vunpack.c.h.b16 %v103
    %v177 = vunpack.c.l.b16 %v104
    %v178 = vunpack.c.l.b16 %v105
    %v179 = vunpack.c.h.b16 %v105
    %v180 = vunpack.c.l.b16 %v106
    %v181 = vunpack.c.l.b16 %v107
    %v182 = vunpack.c.h.b16 %v107
    %v183 = vunpack.c.l.b16 %v108
    %v184 = vunpack.c.l.b16 %v109
    %v185 = vunpack.c.h.b16 %v109
    %v186 = vunpack.c.l.b16 %v110
    %v187 = vunpack.c.l.b16 %v111
    %v188 = vunpack.c.h.b16 %v111
    %v189 = vunpack.c.l.b16 %v112
    %v190 = vunpack.c.l.b16 %v113
    %v191 = vunpack.c.h.b16 %v113
    %v192 = vunpack.c.l.b16 %v114
    %v193 = vunpack.c.l.b16 %v115
    %v194 = vunpack.c.h.b16 %v115
    %v195 = vunpack.c.l.b16 %v116
    %v196 = vunpack.c.l.b16 %v117
    %v197 = vunpack.c.h.b16 %v117
    %v198 = vunpack.c.l.b16 %v118
    %v199 = vunpack.c.l.b16 %v119
    %v200 = vunpack.c.h.b16 %v119
    %v201 = vunpack.c.l.b16 %v120
    %v202 = vunpack.c.l.b16 %v121
    %v203 = vunpack.c.h.b16 %v121
    %v204 = vunpack.c.l.b16 %v122
    %v205 = vunpack.c.l.b16 %v123
    %v206 = vunpack.c.h.b16 %v123
    %v207 = vunpack.c.l.b16 %v124
    %v208 = vunpack.c.l.b16 %v125
    %v209 = vunpack.c.h.b16 %v125
    %v210 = vunpack.c.l.b16 %v126
    %v211 = vunpack.c.l.b16 %v127
    %v212 = vunpack.c.h.b16 %v127
    %v213 = vunpack.c.l.b16 %v128
    %v214 = vunpack.c.l.b16 %v129
    %v215 = vunpack.c.h.b16 %v129
    %v216 = vunpack.c.l.b16 %v130
    %v217 = vunpack.c.l.b16 %v131
    %v218 = vunpack.c.h.b16 %v131
    %v219 = vunpack.c.l.b16 %v132
    %v220 = vunpack.c.l.b16 %v133
    %v221 = vunpack.c.h.b16 %v133
    %v222 = vunpack.c.l.b16 %v134
    %v223 = vpack.c.b16 %v178, %v175
    %v224 = vpack.c.b16 %v179, %v176
    %v225 = vpack.c.b16 %v180, %v177
    %v226 = vpack.c.b16 %v184, %v181
    %v227 = vpack.c.b16 %v185, %v182
    %v228 = vpack.c.b16 %v186, %v183
    %v229 = vpack.c.b16 %v190, %v187
    %v230 = vpack.c.b16 %v191, %v188
    %v231 = vpack.c.b16 %v192, %v189
    %v232 = vpack.c.b16 %v196, %v193
    %v233 = vpack.c.b16 %v197, %v194
    %v234 = vpack.c.b16 %v198, %v195
    %v235 = vpack.c.b16 %v202, %v199
    %v236 = vpack.c.b16 %v203, %v200
    %v237 = vpack.c.b16 %v204, %v201
    %v238 = vpack.c.b16 %v208, %v205
    %v239 = vpack.c.b16 %v209, %v206
    %v240 = vpack.c.b16 %v210, %v207
    %v241 = vpack.c.b16 %v214, %v211
    %v242 = vpack.c.b16 %v215, %v212
    %v243 = vpack.c.b16 %v216, %v213
    %v244 = vpack.c.b16 %v220, %v217
    %v245 = vpack.c.b16 %v221, %v218
    %v246 = vpack.c.b16 %v222, %v219
    %271 = vmatpush.bf16.msra.mxu0 %v244
    %272 = vmatpush.bf16.msra.mxu0 %v241
    %273 = vmatpush.bf16.msra.mxu0 %v238
    %274 = vmatpush.bf16.msra.mxu0 %v235
    %275 = vmatpush.bf16.msra.mxu0 %v232
    %276 = vmatpush.bf16.msra.mxu0 %v229
    %277 = vmatpush.bf16.msra.mxu0 %v226
    %278 = vmatpush.bf16.msra.mxu0 %v223
    %279 = vmatmul.bf16.gmra.mxu0 %v102
    %v280 = vpop.f32.mrf.mxu0
    %v281 = vadd.f32 %v137, %v280
    %v282 = vpop.f32.mrf.mxu0
    %283 = vdwg.mxu0
    %284 = vmatpush.bf16.msra.mxu0 %v245
    %285 = vmatpush.bf16.msra.mxu0 %v242
    %286 = vmatpush.bf16.msra.mxu0 %v239
    %287 = vmatpush.bf16.msra.mxu0 %v236
    %288 = vmatpush.bf16.msra.mxu0 %v233
    %289 = vmatpush.bf16.msra.mxu0 %v230
    %290 = vmatpush.bf16.msra.mxu0 %v227
    %291 = vmatpush.bf16.msra.mxu0 %v224
    %292 = vmatmul.bf16.gmra.mxu0 %v102
    %v293 = vpop.f32.mrf.mxu0
    %v294 = vadd.f32 %v138, %v293
    %v295 = vpop.f32.mrf.mxu0
    %296 = vdwg.mxu0
    %297 = vmatpush.bf16.msra.mxu0 %v246
    %298 = vmatpush.bf16.msra.mxu0 %v243
    %299 = vmatpush.bf16.msra.mxu0 %v240
    %300 = vmatpush.bf16.msra.mxu0 %v237
    %301 = vmatpush.bf16.msra.mxu0 %v234
    %302 = vmatpush.bf16.msra.mxu0 %v231
    %303 = vmatpush.bf16.msra.mxu0 %v228
    %304 = vmatpush.bf16.msra.mxu0 %v225
    %305 = vmatmul.bf16.gmra.mxu0 %v102
    %v306 = vpop.f32.mrf.mxu0
    %v307 = vadd.f32 %v139, %v306
    %v308 = vpop.f32.mrf.mxu0
    %309 = vdwg.mxu0
    %v310 = vmax.f32 %v281, 0.0
    %v311 = vmax.f32 %v294, 0.0
    %v312 = vmax.f32 %v307, 0.0
    %v313 = vpack.c.bf16 %v310, %v310
    %v314 = vpack.c.bf16 %v311, %v311
    %v315 = vpack.c.bf16 %v312, %v312
    %v316 = vld [vmem:[#allocation8] sm:$0xff]
    %v317 = vld [vmem:[#allocation8 + $0x8] sm:$0xf]
    %v318 = vld [vmem:[#allocation8 + $0xc] sm:$0xff]
    %v319 = vld [vmem:[#allocation8 + $0x14] sm:$0xf]
    %v320 = vld [vmem:[#allocation8 + $0x18] sm:$0xff]
    %v321 = vld [vmem:[#allocation8 + $0x20] sm:$0xf]
    %v322 = vld [vmem:[#allocation8 + $0x24] sm:$0xff]
    %v323 = vld [vmem:[#allocation8 + $0x2c] sm:$0xf]
    %v324 = vld [vmem:[#allocation8 + $0x30] sm:$0xff]
    %v325 = vld [vmem:[#allocation8 + $0x38] sm:$0xf]
    %v326 = vld [vmem:[#allocation8 + $0x3c] sm:$0xff]
    %v327 = vld [vmem:[#allocation8 + $0x44] sm:$0xf]
    %v328 = vld [vmem:[#allocation8 + $0x48] sm:$0xff]
    %v329 = vld [vmem:[#allocation8 + $0x50] sm:$0xf]
    %v330 = vld [vmem:[#allocation8 + $0x54] sm:$0xff]
    %v331 = vld [vmem:[#allocation8 + $0x5c] sm:$0xf]
    %v332 = vld [vmem:[#allocation8 + $0x60] sm:$0xff]
    %v333 = vld [vmem:[#allocation8 + $0x68] sm:$0xf]
    %v334 = vld [vmem:[#allocation8 + $0x6c] sm:$0xff]
    %v335 = vld [vmem:[#allocation8 + $0x74] sm:$0xf]
    %v336 = vld [vmem:[#allocation8 + $0x78] sm:$0xff]
    %v337 = vld [vmem:[#allocation8 + $0x80] sm:$0xf]
    %v338 = vld [vmem:[#allocation8 + $0x84] sm:$0xff]
    %v339 = vld [vmem:[#allocation8 + $0x8c] sm:$0xf]
    %v340 = vld [vmem:[#allocation8 + $0x90] sm:$0xff]
    %v341 = vld [vmem:[#allocation8 + $0x98] sm:$0xf]
    %v342 = vld [vmem:[#allocation8 + $0x9c] sm:$0xff]
    %v343 = vld [vmem:[#allocation8 + $0xa4] sm:$0xf]
    %v344 = vld [vmem:[#allocation8 + $0xa8] sm:$0xff]
    %v345 = vld [vmem:[#allocation8 + $0xb0] sm:$0xf]
    %v346 = vld [vmem:[#allocation8 + $0xb4] sm:$0xff]
    %v347 = vld [vmem:[#allocation8 + $0xbc] sm:$0xf]
    %v348 = vld [vmem:[#allocation8 + $0xc0] sm:$0xff]
    %v349 = vld [vmem:[#allocation8 + $0xc8] sm:$0xf]
    %v350 = vld [vmem:[#allocation8 + $0xcc] sm:$0xff]
    %v351 = vld [vmem:[#allocation8 + $0xd4] sm:$0xf]
    %v352 = vld [vmem:[#allocation8 + $0xd8] sm:$0xff]
    %v353 = vld [vmem:[#allocation8 + $0xe0] sm:$0xf]
    %v354 = vld [vmem:[#allocation8 + $0xe4] sm:$0xff]
    %v355 = vld [vmem:[#allocation8 + $0xec] sm:$0xf]
    %v356 = vld [vmem:[#allocation8 + $0xf0] sm:$0xff]
    %v357 = vld [vmem:[#allocation8 + $0xf8] sm:$0xf]
    %v358 = vld [vmem:[#allocation8 + $0xfc] sm:$0xff]
    %v359 = vld [vmem:[#allocation8 + $0x104] sm:$0xf]
    %v360 = vld [vmem:[#allocation8 + $0x108] sm:$0xff]
    %v361 = vld [vmem:[#allocation8 + $0x110] sm:$0xf]
    %v362 = vld [vmem:[#allocation8 + $0x114] sm:$0xff]
    %v363 = vld [vmem:[#allocation8 + $0x11c] sm:$0xf]
    %v364 = vld [vmem:[#allocation8 + $0x120] sm:$0xff]
    %v365 = vld [vmem:[#allocation8 + $0x128] sm:$0xf]
    %v366 = vld [vmem:[#allocation8 + $0x12c] sm:$0xff]
    %v367 = vld [vmem:[#allocation8 + $0x134] sm:$0xf]
    %v368 = vld [vmem:[#allocation8 + $0x138] sm:$0xff]
    %v369 = vld [vmem:[#allocation8 + $0x140] sm:$0xf]
    %v370 = vld [vmem:[#allocation8 + $0x144] sm:$0xff]
    %v371 = vld [vmem:[#allocation8 + $0x14c] sm:$0xf]
    %v372 = vld [vmem:[#allocation8 + $0x150] sm:$0xff]
    %v373 = vld [vmem:[#allocation8 + $0x158] sm:$0xf]
    %v374 = vld [vmem:[#allocation8 + $0x15c] sm:$0xff]
    %v375 = vld [vmem:[#allocation8 + $0x164] sm:$0xf]
    %v376 = vld [vmem:[#allocation8 + $0x168] sm:$0xff]
    %v377 = vld [vmem:[#allocation8 + $0x170] sm:$0xf]
    %v378 = vld [vmem:[#allocation8 + $0x174] sm:$0xff]
    %v379 = vld [vmem:[#allocation8 + $0x17c] sm:$0xf]
    %v380 = vld [vmem:[#allocation8 + $0x180] sm:$0xff]
    %v381 = vld [vmem:[#allocation8 + $0x188] sm:$0xf]
    %v382 = vld [vmem:[#allocation8 + $0x18c] sm:$0xff]
    %v383 = vld [vmem:[#allocation8 + $0x194] sm:$0xf]
    %v384 = vld [vmem:[#allocation8 + $0x198] sm:$0xff]
    %v385 = vld [vmem:[#allocation8 + $0x1a0] sm:$0xf]
    %v386 = vld [vmem:[#allocation8 + $0x1a4] sm:$0xff]
    %v387 = vld [vmem:[#allocation8 + $0x1ac] sm:$0xf]
    %v388 = vld [vmem:[#allocation8 + $0x1b0] sm:$0xff]
    %v389 = vld [vmem:[#allocation8 + $0x1b8] sm:$0xf]
    %v390 = vld [vmem:[#allocation8 + $0x1bc] sm:$0xff]
    %v391 = vld [vmem:[#allocation8 + $0x1c4] sm:$0xf]
    %v392 = vld [vmem:[#allocation8 + $0x1c8] sm:$0xff]
    %v393 = vld [vmem:[#allocation8 + $0x1d0] sm:$0xf]
    %v394 = vld [vmem:[#allocation8 + $0x1d4] sm:$0xff]
    %v395 = vld [vmem:[#allocation8 + $0x1dc] sm:$0xf]
    %v396 = vld [vmem:[#allocation8 + $0x1e0] sm:$0xff]
    %v397 = vld [vmem:[#allocation8 + $0x1e8] sm:$0xf]
    %v398 = vld [vmem:[#allocation8 + $0x1ec] sm:$0xff]
    %v399 = vld [vmem:[#allocation8 + $0x1f4] sm:$0xf]
    %v400 = vld [vmem:[#allocation8 + $0x1f8] sm:$0xff]
    %v401 = vld [vmem:[#allocation8 + $0x200] sm:$0xf]
    %v402 = vld [vmem:[#allocation8 + $0x204] sm:$0xff]
    %v403 = vld [vmem:[#allocation8 + $0x20c] sm:$0xf]
    %v404 = vld [vmem:[#allocation8 + $0x210] sm:$0xff]
    %v405 = vld [vmem:[#allocation8 + $0x218] sm:$0xf]
    %v406 = vld [vmem:[#allocation8 + $0x21c] sm:$0xff]
    %v407 = vld [vmem:[#allocation8 + $0x224] sm:$0xf]
    %v408 = vld [vmem:[#allocation8 + $0x228] sm:$0xff]
    %v409 = vld [vmem:[#allocation8 + $0x230] sm:$0xf]
    %v410 = vld [vmem:[#allocation8 + $0x234] sm:$0xff]
    %v411 = vld [vmem:[#allocation8 + $0x23c] sm:$0xf]
    %v412 = vld [vmem:[%s4] sm:$0x7]
    %v414 = vperm.slane %v412, 0
    %v415 = vperm.slane %v412, 1
    %v416 = vperm.slane %v412, 2
    %v516 = vunpack.c.l.b16 %v316
    %v517 = vunpack.c.h.b16 %v316
    %v518 = vunpack.c.l.b16 %v317
    %v519 = vunpack.c.l.b16 %v318
    %v520 = vunpack.c.h.b16 %v318
    %v521 = vunpack.c.l.b16 %v319
    %v522 = vunpack.c.l.b16 %v320
    %v523 = vunpack.c.h.b16 %v320
    %v524 = vunpack.c.l.b16 %v321
    %v525 = vunpack.c.l.b16 %v322
    %v526 = vunpack.c.h.b16 %v322
    %v527 = vunpack.c.l.b16 %v323
    %v528 = vunpack.c.l.b16 %v324
    %v529 = vunpack.c.h.b16 %v324
    %v530 = vunpack.c.l.b16 %v325
    %v531 = vunpack.c.l.b16 %v326
    %v532 = vunpack.c.h.b16 %v326
    %v533 = vunpack.c.l.b16 %v327
    %v534 = vunpack.c.l.b16 %v328
    %v535 = vunpack.c.h.b16 %v328
    %v536 = vunpack.c.l.b16 %v329
    %v537 = vunpack.c.l.b16 %v330
    %v538 = vunpack.c.h.b16 %v330
    %v539 = vunpack.c.l.b16 %v331
    %v540 = vunpack.c.l.b16 %v332
    %v541 = vunpack.c.h.b16 %v332
    %v542 = vunpack.c.l.b16 %v333
    %v543 = vunpack.c.l.b16 %v334
    %v544 = vunpack.c.h.b16 %v334
    %v545 = vunpack.c.l.b16 %v335
    %v546 = vunpack.c.l.b16 %v336
    %v547 = vunpack.c.h.b16 %v336
    %v548 = vunpack.c.l.b16 %v337
    %v549 = vunpack.c.l.b16 %v338
    %v550 = vunpack.c.h.b16 %v338
    %v551 = vunpack.c.l.b16 %v339
    %v552 = vunpack.c.l.b16 %v340
    %v553 = vunpack.c.h.b16 %v340
    %v554 = vunpack.c.l.b16 %v341
    %v555 = vunpack.c.l.b16 %v342
    %v556 = vunpack.c.h.b16 %v342
    %v557 = vunpack.c.l.b16 %v343
    %v558 = vunpack.c.l.b16 %v344
    %v559 = vunpack.c.h.b16 %v344
    %v560 = vunpack.c.l.b16 %v345
    %v561 = vunpack.c.l.b16 %v346
    %v562 = vunpack.c.h.b16 %v346
    %v563 = vunpack.c.l.b16 %v347
    %v564 = vunpack.c.l.b16 %v348
    %v565 = vunpack.c.h.b16 %v348
    %v566 = vunpack.c.l.b16 %v349
    %v567 = vunpack.c.l.b16 %v350
    %v568 = vunpack.c.h.b16 %v350
    %v569 = vunpack.c.l.b16 %v351
    %v570 = vunpack.c.l.b16 %v352
    %v571 = vunpack.c.h.b16 %v352
    %v572 = vunpack.c.l.b16 %v353
    %v573 = vunpack.c.l.b16 %v354
    %v574 = vunpack.c.h.b16 %v354
    %v575 = vunpack.c.l.b16 %v355
    %v576 = vunpack.c.l.b16 %v356
    %v577 = vunpack.c.h.b16 %v356
    %v578 = vunpack.c.l.b16 %v357
    %v579 = vunpack.c.l.b16 %v358
    %v580 = vunpack.c.h.b16 %v358
    %v581 = vunpack.c.l.b16 %v359
    %v582 = vunpack.c.l.b16 %v360
    %v583 = vunpack.c.h.b16 %v360
    %v584 = vunpack.c.l.b16 %v361
    %v585 = vunpack.c.l.b16 %v362
    %v586 = vunpack.c.h.b16 %v362
    %v587 = vunpack.c.l.b16 %v363
    %v588 = vunpack.c.l.b16 %v364
    %v589 = vunpack.c.h.b16 %v364
    %v590 = vunpack.c.l.b16 %v365
    %v591 = vunpack.c.l.b16 %v366
    %v592 = vunpack.c.h.b16 %v366
    %v593 = vunpack.c.l.b16 %v367
    %v594 = vunpack.c.l.b16 %v368
    %v595 = vunpack.c.h.b16 %v368
    %v596 = vunpack.c.l.b16 %v369
    %v597 = vunpack.c.l.b16 %v370
    %v598 = vunpack.c.h.b16 %v370
    %v599 = vunpack.c.l.b16 %v371
    %v600 = vunpack.c.l.b16 %v372
    %v601 = vunpack.c.h.b16 %v372
    %v602 = vunpack.c.l.b16 %v373
    %v603 = vunpack.c.l.b16 %v374
    %v604 = vunpack.c.h.b16 %v374
    %v605 = vunpack.c.l.b16 %v375
    %v606 = vunpack.c.l.b16 %v376
    %v607 = vunpack.c.h.b16 %v376
    %v608 = vunpack.c.l.b16 %v377
    %v609 = vunpack.c.l.b16 %v378
    %v610 = vunpack.c.h.b16 %v378
    %v611 = vunpack.c.l.b16 %v379
    %v612 = vunpack.c.l.b16 %v380
    %v613 = vunpack.c.h.b16 %v380
    %v614 = vunpack.c.l.b16 %v381
    %v615 = vunpack.c.l.b16 %v382
    %v616 = vunpack.c.h.b16 %v382
    %v617 = vunpack.c.l.b16 %v383
    %v618 = vunpack.c.l.b16 %v384
    %v619 = vunpack.c.h.b16 %v384
    %v620 = vunpack.c.l.b16 %v385
    %v621 = vunpack.c.l.b16 %v386
    %v622 = vunpack.c.h.b16 %v386
    %v623 = vunpack.c.l.b16 %v387
    %v624 = vunpack.c.l.b16 %v388
    %v625 = vunpack.c.h.b16 %v388
    %v626 = vunpack.c.l.b16 %v389
    %v627 = vunpack.c.l.b16 %v390
    %v628 = vunpack.c.h.b16 %v390
    %v629 = vunpack.c.l.b16 %v391
    %v630 = vunpack.c.l.b16 %v392
    %v631 = vunpack.c.h.b16 %v392
    %v632 = vunpack.c.l.b16 %v393
    %v633 = vunpack.c.l.b16 %v394
    %v634 = vunpack.c.h.b16 %v394
    %v635 = vunpack.c.l.b16 %v395
    %v636 = vunpack.c.l.b16 %v396
    %v637 = vunpack.c.h.b16 %v396
    %v638 = vunpack.c.l.b16 %v397
    %v639 = vunpack.c.l.b16 %v398
    %v640 = vunpack.c.h.b16 %v398
    %v641 = vunpack.c.l.b16 %v399
    %v642 = vunpack.c.l.b16 %v400
    %v643 = vunpack.c.h.b16 %v400
    %v644 = vunpack.c.l.b16 %v401
    %v645 = vunpack.c.l.b16 %v402
    %v646 = vunpack.c.h.b16 %v402
    %v647 = vunpack.c.l.b16 %v403
    %v648 = vunpack.c.l.b16 %v404
    %v649 = vunpack.c.h.b16 %v404
    %v650 = vunpack.c.l.b16 %v405
    %v651 = vunpack.c.l.b16 %v406
    %v652 = vunpack.c.h.b16 %v406
    %v653 = vunpack.c.l.b16 %v407
    %v654 = vunpack.c.l.b16 %v408
    %v655 = vunpack.c.h.b16 %v408
    %v656 = vunpack.c.l.b16 %v409
    %v657 = vunpack.c.l.b16 %v410
    %v658 = vunpack.c.h.b16 %v410
    %v659 = vunpack.c.l.b16 %v411
    %v660 = vpack.c.b16 %v519, %v516
    %v661 = vpack.c.b16 %v520, %v517
    %v662 = vpack.c.b16 %v521, %v518
    %v663 = vpack.c.b16 %v525, %v522
    %v664 = vpack.c.b16 %v526, %v523
    %v665 = vpack.c.b16 %v527, %v524
    %v666 = vpack.c.b16 %v531, %v528
    %v667 = vpack.c.b16 %v532, %v529
    %v668 = vpack.c.b16 %v533, %v530
    %v669 = vpack.c.b16 %v537, %v534
    %v670 = vpack.c.b16 %v538, %v535
    %v671 = vpack.c.b16 %v539, %v536
    %v672 = vpack.c.b16 %v543, %v540
    %v673 = vpack.c.b16 %v544, %v541
    %v674 = vpack.c.b16 %v545, %v542
    %v675 = vpack.c.b16 %v549, %v546
    %v676 = vpack.c.b16 %v550, %v547
    %v677 = vpack.c.b16 %v551, %v548
    %v678 = vpack.c.b16 %v555, %v552
    %v679 = vpack.c.b16 %v556, %v553
    %v680 = vpack.c.b16 %v557, %v554
    %v681 = vpack.c.b16 %v561, %v558
    %v682 = vpack.c.b16 %v562, %v559
    %v683 = vpack.c.b16 %v563, %v560
    %v684 = vpack.c.b16 %v567, %v564
    %v685 = vpack.c.b16 %v568, %v565
    %v686 = vpack.c.b16 %v569, %v566
    %v687 = vpack.c.b16 %v573, %v570
    %v688 = vpack.c.b16 %v574, %v571
    %v689 = vpack.c.b16 %v575, %v572
    %v690 = vpack.c.b16 %v579, %v576
    %v691 = vpack.c.b16 %v580, %v577
    %v692 = vpack.c.b16 %v581, %v578
    %v693 = vpack.c.b16 %v585, %v582
    %v694 = vpack.c.b16 %v586, %v583
    %v695 = vpack.c.b16 %v587, %v584
    %v696 = vpack.c.b16 %v591, %v588
    %v697 = vpack.c.b16 %v592, %v589
    %v698 = vpack.c.b16 %v593, %v590
    %v699 = vpack.c.b16 %v597, %v594
    %v700 = vpack.c.b16 %v598, %v595
    %v701 = vpack.c.b16 %v599, %v596
    %v702 = vpack.c.b16 %v603, %v600
    %v703 = vpack.c.b16 %v604, %v601
    %v704 = vpack.c.b16 %v605, %v602
    %v705 = vpack.c.b16 %v609, %v606
    %v706 = vpack.c.b16 %v610, %v607
    %v707 = vpack.c.b16 %v611, %v608
    %v708 = vpack.c.b16 %v615, %v612
    %v709 = vpack.c.b16 %v616, %v613
    %v710 = vpack.c.b16 %v617, %v614
    %v711 = vpack.c.b16 %v621, %v618
    %v712 = vpack.c.b16 %v622, %v619
    %v713 = vpack.c.b16 %v623, %v620
    %v714 = vpack.c.b16 %v627, %v624
    %v715 = vpack.c.b16 %v628, %v625
    %v716 = vpack.c.b16 %v629, %v626
    %v717 = vpack.c.b16 %v633, %v630
    %v718 = vpack.c.b16 %v634, %v631
    %v719 = vpack.c.b16 %v635, %v632
    %v720 = vpack.c.b16 %v639, %v636
    %v721 = vpack.c.b16 %v640, %v637
    %v722 = vpack.c.b16 %v641, %v638
    %v723 = vpack.c.b16 %v645, %v642
    %v724 = vpack.c.b16 %v646, %v643
    %v725 = vpack.c.b16 %v647, %v644
    %v726 = vpack.c.b16 %v651, %v648
    %v727 = vpack.c.b16 %v652, %v649
    %v728 = vpack.c.b16 %v653, %v650
    %v729 = vpack.c.b16 %v657, %v654
    %v730 = vpack.c.b16 %v658, %v655
    %v731 = vpack.c.b16 %v659, %v656
    %804 = vmatpush.bf16.msra.mxu0 %v681
    %805 = vmatpush.bf16.msra.mxu0 %v678
    %806 = vmatpush.bf16.msra.mxu0 %v675
    %807 = vmatpush.bf16.msra.mxu0 %v672
    %808 = vmatpush.bf16.msra.mxu0 %v669
    %809 = vmatpush.bf16.msra.mxu0 %v666
    %810 = vmatpush.bf16.msra.mxu0 %v663
    %811 = vmatpush.bf16.msra.mxu0 %v660
    %812 = vmatmul.bf16.gmra.mxu0 %v313
    %v813 = vpop.f32.mrf.mxu0
    %v814 = vadd.f32 %v414, %v813
    %v815 = vpop.f32.mrf.mxu0
    %816 = vdwg.mxu0
    %817 = vmatpush.bf16.msra.mxu0 %v705
    %818 = vmatpush.bf16.msra.mxu0 %v702
    %819 = vmatpush.bf16.msra.mxu0 %v699
    %820 = vmatpush.bf16.msra.mxu0 %v696
    %821 = vmatpush.bf16.msra.mxu0 %v693
    %822 = vmatpush.bf16.msra.mxu0 %v690
    %823 = vmatpush.bf16.msra.mxu0 %v687
    %824 = vmatpush.bf16.msra.mxu0 %v684
    %825 = vmatmul.bf16.gmra.mxu0 %v314
    %v826 = vpop.f32.mrf.mxu0
    %v827 = vadd.f32 %v814, %v826
    %v828 = vpop.f32.mrf.mxu0
    %829 = vdwg.mxu0
    %830 = vmatpush.bf16.msra.mxu0 %v729
    %831 = vmatpush.bf16.msra.mxu0 %v726
    %832 = vmatpush.bf16.msra.mxu0 %v723
    %833 = vmatpush.bf16.msra.mxu0 %v720
    %834 = vmatpush.bf16.msra.mxu0 %v717
    %835 = vmatpush.bf16.msra.mxu0 %v714
    %836 = vmatpush.bf16.msra.mxu0 %v711
    %837 = vmatpush.bf16.msra.mxu0 %v708
    %838 = vmatmul.bf16.gmra.mxu0 %v315
    %v839 = vpop.f32.mrf.mxu0
    %v840 = vadd.f32 %v827, %v839
    %v841 = vpop.f32.mrf.mxu0
    %842 = vdwg.mxu0
    %843 = vmatpush.bf16.msra.mxu0 %v682
    %844 = vmatpush.bf16.msra.mxu0 %v679
    %845 = vmatpush.bf16.msra.mxu0 %v676
    %846 = vmatpush.bf16.msra.mxu0 %v673
    %847 = vmatpush.bf16.msra.mxu0 %v670
    %848 = vmatpush.bf16.msra.mxu0 %v667
    %849 = vmatpush.bf16.msra.mxu0 %v664
    %850 = vmatpush.bf16.msra.mxu0 %v661
    %851 = vmatmul.bf16.gmra.mxu0 %v313
    %v852 = vpop.f32.mrf.mxu0
    %v853 = vadd.f32 %v415, %v852
    %v854 = vpop.f32.mrf.mxu0
    %855 = vdwg.mxu0
    %856 = vmatpush.bf16.msra.mxu0 %v706
    %857 = vmatpush.bf16.msra.mxu0 %v703
    %858 = vmatpush.bf16.msra.mxu0 %v700
    %859 = vmatpush.bf16.msra.mxu0 %v697
    %860 = vmatpush.bf16.msra.mxu0 %v694
    %861 = vmatpush.bf16.msra.mxu0 %v691
    %862 = vmatpush.bf16.msra.mxu0 %v688
    %863 = vmatpush.bf16.msra.mxu0 %v685
    %864 = vmatmul.bf16.gmra.mxu0 %v314
    %v865 = vpop.f32.mrf.mxu0
    %v866 = vadd.f32 %v853, %v865
    %v867 = vpop.f32.mrf.mxu0
    %868 = vdwg.mxu0
    %869 = vmatpush.bf16.msra.mxu0 %v730
    %870 = vmatpush.bf16.msra.mxu0 %v727
    %871 = vmatpush.bf16.msra.mxu0 %v724
    %872 = vmatpush.bf16.msra.mxu0 %v721
    %873 = vmatpush.bf16.msra.mxu0 %v718
    %874 = vmatpush.bf16.msra.mxu0 %v715
    %875 = vmatpush.bf16.msra.mxu0 %v712
    %876 = vmatpush.bf16.msra.mxu0 %v709
    %877 = vmatmul.bf16.gmra.mxu0 %v315
    %v878 = vpop.f32.mrf.mxu0
    %v879 = vadd.f32 %v866, %v878
    %v880 = vpop.f32.mrf.mxu0
    %881 = vdwg.mxu0
    %882 = vmatpush.bf16.msra.mxu0 %v683
    %883 = vmatpush.bf16.msra.mxu0 %v680
    %884 = vmatpush.bf16.msra.mxu0 %v677
    %885 = vmatpush.bf16.msra.mxu0 %v674
    %886 = vmatpush.bf16.msra.mxu0 %v671
    %887 = vmatpush.bf16.msra.mxu0 %v668
    %888 = vmatpush.bf16.msra.mxu0 %v665
    %889 = vmatpush.bf16.msra.mxu0 %v662
    %890 = vmatmul.bf16.gmra.mxu0 %v313
    %v891 = vpop.f32.mrf.mxu0
    %v892 = vadd.f32 %v416, %v891
    %v893 = vpop.f32.mrf.mxu0
    %894 = vdwg.mxu0
    %895 = vmatpush.bf16.msra.mxu0 %v707
    %896 = vmatpush.bf16.msra.mxu0 %v704
    %897 = vmatpush.bf16.msra.mxu0 %v701
    %898 = vmatpush.bf16.msra.mxu0 %v698
    %899 = vmatpush.bf16.msra.mxu0 %v695
    %900 = vmatpush.bf16.msra.mxu0 %v692
    %901 = vmatpush.bf16.msra.mxu0 %v689
    %902 = vmatpush.bf16.msra.mxu0 %v686
    %903 = vmatmul.bf16.gmra.mxu0 %v314
    %v904 = vpop.f32.mrf.mxu0
    %v905 = vadd.f32 %v892, %v904
    %v906 = vpop.f32.mrf.mxu0
    %907 = vdwg.mxu0
    %908 = vmatpush.bf16.msra.mxu0 %v731
    %909 = vmatpush.bf16.msra.mxu0 %v728
    %910 = vmatpush.bf16.msra.mxu0 %v725
    %911 = vmatpush.bf16.msra.mxu0 %v722
    %912 = vmatpush.bf16.msra.mxu0 %v719
    %913 = vmatpush.bf16.msra.mxu0 %v716
    %914 = vmatpush.bf16.msra.mxu0 %v713
    %915 = vmatpush.bf16.msra.mxu0 %v710
    %916 = vmatmul.bf16.gmra.mxu0 %v315
    %v917 = vpop.f32.mrf.mxu0
    %v918 = vadd.f32 %v905, %v917
    %v919 = vpop.f32.mrf.mxu0
    %920 = vdwg.mxu0
    %v921 = vadd.f32 %v840, %v101
    %v922 = vadd.f32 %v879, %v101
    %v923 = vadd.f32 %v918, %v101
    %v924 = vmax.f32 %v921, 0.0
    %v925 = vmax.f32 %v922, 0.0
    %v926 = vmax.f32 %v923, 0.0
    %v927 = vpack.c.bf16 %v924, %v924
    %v928 = vpack.c.bf16 %v925, %v925
    %v929 = vpack.c.bf16 %v926, %v926
    %v930 = vld [vmem:[#allocation10] sm:$0xf]
    %v931 = vld [vmem:[#allocation10 + $0x4] sm:$0xf]
    %v932 = vld [vmem:[#allocation10 + $0x8] sm:$0xf]
    %v933 = vld [vmem:[#allocation10 + $0xc] sm:$0xf]
    %v934 = vld [vmem:[#allocation10 + $0x10] sm:$0xf]
    %v935 = vld [vmem:[#allocation10 + $0x14] sm:$0xf]
    %v936 = vld [vmem:[#allocation10 + $0x18] sm:$0xf]
    %v937 = vld [vmem:[#allocation10 + $0x1c] sm:$0xf]
    %v938 = vld [vmem:[#allocation10 + $0x20] sm:$0xf]
    %v939 = vld [vmem:[#allocation10 + $0x24] sm:$0xf]
    %v940 = vld [vmem:[#allocation10 + $0x28] sm:$0xf]
    %v941 = vld [vmem:[#allocation10 + $0x2c] sm:$0xf]
    %v942 = vld [vmem:[#allocation10 + $0x30] sm:$0xf]
    %v943 = vld [vmem:[#allocation10 + $0x34] sm:$0xf]
    %v944 = vld [vmem:[#allocation10 + $0x38] sm:$0xf]
    %v945 = vld [vmem:[#allocation10 + $0x3c] sm:$0xf]
    %v946 = vld [vmem:[#allocation10 + $0x40] sm:$0xf]
    %v947 = vld [vmem:[#allocation10 + $0x44] sm:$0xf]
    %v948 = vld [vmem:[#allocation10 + $0x48] sm:$0xf]
    %v949 = vld [vmem:[#allocation10 + $0x4c] sm:$0xf]
    %v950 = vld [vmem:[#allocation10 + $0x50] sm:$0xf]
    %v951 = vld [vmem:[#allocation10 + $0x54] sm:$0xf]
    %v952 = vld [vmem:[#allocation10 + $0x58] sm:$0xf]
    %v953 = vld [vmem:[#allocation10 + $0x5c] sm:$0xf]
    %v954 = vld [vmem:[#allocation10 + $0x60] sm:$0xf]
    %v955 = vld [vmem:[#allocation10 + $0x64] sm:$0xf]
    %v956 = vld [vmem:[#allocation10 + $0x68] sm:$0xf]
    %v957 = vld [vmem:[#allocation10 + $0x6c] sm:$0xf]
    %v958 = vld [vmem:[#allocation10 + $0x70] sm:$0xf]
    %v959 = vld [vmem:[#allocation10 + $0x74] sm:$0xf]
    %v960 = vld [vmem:[#allocation10 + $0x78] sm:$0xf]
    %v961 = vld [vmem:[#allocation10 + $0x7c] sm:$0xf]
    %v962 = vld [vmem:[#allocation10 + $0x80] sm:$0xf]
    %v963 = vld [vmem:[#allocation10 + $0x84] sm:$0xf]
    %v964 = vld [vmem:[#allocation10 + $0x88] sm:$0xf]
    %v965 = vld [vmem:[#allocation10 + $0x8c] sm:$0xf]
    %v966 = vld [vmem:[#allocation10 + $0x90] sm:$0xf]
    %v967 = vld [vmem:[#allocation10 + $0x94] sm:$0xf]
    %v968 = vld [vmem:[#allocation10 + $0x98] sm:$0xf]
    %v969 = vld [vmem:[#allocation10 + $0x9c] sm:$0xf]
    %v970 = vld [vmem:[#allocation10 + $0xa0] sm:$0xf]
    %v971 = vld [vmem:[#allocation10 + $0xa4] sm:$0xf]
    %v972 = vld [vmem:[#allocation10 + $0xa8] sm:$0xf]
    %v973 = vld [vmem:[#allocation10 + $0xac] sm:$0xf]
    %v974 = vld [vmem:[#allocation10 + $0xb0] sm:$0xf]
    %v975 = vld [vmem:[#allocation10 + $0xb4] sm:$0xf]
    %v976 = vld [vmem:[#allocation10 + $0xb8] sm:$0xf]
    %v977 = vld [vmem:[#allocation10 + $0xbc] sm:$0xf]
    %v978 = vld [vmem:[%s6] sm:$0x1]
    %v980 = vperm.slane %v978, 0
    %v1030 = vunpack.c.l.b16 %v930
    %v1031 = vunpack.c.l.b16 %v931
    %v1032 = vunpack.c.l.b16 %v932
    %v1033 = vunpack.c.l.b16 %v933
    %v1034 = vunpack.c.l.b16 %v934
    %v1035 = vunpack.c.l.b16 %v935
    %v1036 = vunpack.c.l.b16 %v936
    %v1037 = vunpack.c.l.b16 %v937
    %v1038 = vunpack.c.l.b16 %v938
    %v1039 = vunpack.c.l.b16 %v939
    %v1040 = vunpack.c.l.b16 %v940
    %v1041 = vunpack.c.l.b16 %v941
    %v1042 = vunpack.c.l.b16 %v942
    %v1043 = vunpack.c.l.b16 %v943
    %v1044 = vunpack.c.l.b16 %v944
    %v1045 = vunpack.c.l.b16 %v945
    %v1046 = vunpack.c.l.b16 %v946
    %v1047 = vunpack.c.l.b16 %v947
    %v1048 = vunpack.c.l.b16 %v948
    %v1049 = vunpack.c.l.b16 %v949
    %v1050 = vunpack.c.l.b16 %v950
    %v1051 = vunpack.c.l.b16 %v951
    %v1052 = vunpack.c.l.b16 %v952
    %v1053 = vunpack.c.l.b16 %v953
    %v1054 = vunpack.c.l.b16 %v954
    %v1055 = vunpack.c.l.b16 %v955
    %v1056 = vunpack.c.l.b16 %v956
    %v1057 = vunpack.c.l.b16 %v957
    %v1058 = vunpack.c.l.b16 %v958
    %v1059 = vunpack.c.l.b16 %v959
    %v1060 = vunpack.c.l.b16 %v960
    %v1061 = vunpack.c.l.b16 %v961
    %v1062 = vunpack.c.l.b16 %v962
    %v1063 = vunpack.c.l.b16 %v963
    %v1064 = vunpack.c.l.b16 %v964
    %v1065 = vunpack.c.l.b16 %v965
    %v1066 = vunpack.c.l.b16 %v966
    %v1067 = vunpack.c.l.b16 %v967
    %v1068 = vunpack.c.l.b16 %v968
    %v1069 = vunpack.c.l.b16 %v969
    %v1070 = vunpack.c.l.b16 %v970
    %v1071 = vunpack.c.l.b16 %v971
    %v1072 = vunpack.c.l.b16 %v972
    %v1073 = vunpack.c.l.b16 %v973
    %v1074 = vunpack.c.l.b16 %v974
    %v1075 = vunpack.c.l.b16 %v975
    %v1076 = vunpack.c.l.b16 %v976
    %v1077 = vunpack.c.l.b16 %v977
    %v1078 = vpack.c.b16 %v1031, %v1030
    %v1079 = vpack.c.b16 %v1033, %v1032
    %v1080 = vpack.c.b16 %v1035, %v1034
    %v1081 = vpack.c.b16 %v1037, %v1036
    %v1082 = vpack.c.b16 %v1039, %v1038
    %v1083 = vpack.c.b16 %v1041, %v1040
    %v1084 = vpack.c.b16 %v1043, %v1042
    %v1085 = vpack.c.b16 %v1045, %v1044
    %v1086 = vpack.c.b16 %v1047, %v1046
    %v1087 = vpack.c.b16 %v1049, %v1048
    %v1088 = vpack.c.b16 %v1051, %v1050
    %v1089 = vpack.c.b16 %v1053, %v1052
    %v1090 = vpack.c.b16 %v1055, %v1054
    %v1091 = vpack.c.b16 %v1057, %v1056
    %v1092 = vpack.c.b16 %v1059, %v1058
    %v1093 = vpack.c.b16 %v1061, %v1060
    %v1094 = vpack.c.b16 %v1063, %v1062
    %v1095 = vpack.c.b16 %v1065, %v1064
    %v1096 = vpack.c.b16 %v1067, %v1066
    %v1097 = vpack.c.b16 %v1069, %v1068
    %v1098 = vpack.c.b16 %v1071, %v1070
    %v1099 = vpack.c.b16 %v1073, %v1072
    %v1100 = vpack.c.b16 %v1075, %v1074
    %v1101 = vpack.c.b16 %v1077, %v1076
    %1126 = vmatpush.bf16.msra.mxu0 %v1085
    %1127 = vmatpush.bf16.msra.mxu0 %v1084
    %1128 = vmatpush.bf16.msra.mxu0 %v1083
    %1129 = vmatpush.bf16.msra.mxu0 %v1082
    %1130 = vmatpush.bf16.msra.mxu0 %v1081
    %1131 = vmatpush.bf16.msra.mxu0 %v1080
    %1132 = vmatpush.bf16.msra.mxu0 %v1079
    %1133 = vmatpush.bf16.msra.mxu0 %v1078
    %1134 = vmatmul.bf16.gmra.mxu0 %v927
    %v1135 = vpop.f32.mrf.mxu0
    %v1136 = vadd.f32 %v980, %v1135
    %v1137 = vpop.f32.mrf.mxu0
    %1138 = vdwg.mxu0
    %1139 = vmatpush.bf16.msra.mxu0 %v1093
    %1140 = vmatpush.bf16.msra.mxu0 %v1092
    %1141 = vmatpush.bf16.msra.mxu0 %v1091
    %1142 = vmatpush.bf16.msra.mxu0 %v1090
    %1143 = vmatpush.bf16.msra.mxu0 %v1089
    %1144 = vmatpush.bf16.msra.mxu0 %v1088
    %1145 = vmatpush.bf16.msra.mxu0 %v1087
    %1146 = vmatpush.bf16.msra.mxu0 %v1086
    %1147 = vmatmul.bf16.gmra.mxu0 %v928
    %v1148 = vpop.f32.mrf.mxu0
    %v1149 = vadd.f32 %v1136, %v1148
    %v1150 = vpop.f32.mrf.mxu0
    %1151 = vdwg.mxu0
    %1152 = vmatpush.bf16.msra.mxu0 %v1101
    %1153 = vmatpush.bf16.msra.mxu0 %v1100
    %1154 = vmatpush.bf16.msra.mxu0 %v1099
    %1155 = vmatpush.bf16.msra.mxu0 %v1098
    %1156 = vmatpush.bf16.msra.mxu0 %v1097
    %1157 = vmatpush.bf16.msra.mxu0 %v1096
    %1158 = vmatpush.bf16.msra.mxu0 %v1095
    %1159 = vmatpush.bf16.msra.mxu0 %v1094
    %1160 = vmatmul.bf16.gmra.mxu0 %v929
    %v1161 = vpop.f32.mrf.mxu0
    %v1162 = vadd.f32 %v1149, %v1161
    %v1163 = vpop.f32.mrf.mxu0
    %1164 = vdwg.mxu0
    %v1165 = vlaneseq
    %v1166 = vand.u32 %v1165, 127
    %v1167 = vand.u32 %v1166, 1
    %vm1168 = vcmp.eq.s32.totalorder %v1167, 0
    %v1169 = vmul.f32 %v1162, %v1162
    %1170 = vrot.lane.b32.xlu0 %v1169, 1
    %v1171 = vpop.permute.xlu0 %1170
    %1172 = vrot.lane.b32.xlu0 %v1169, 127
    %v1173 = vpop.permute.xlu0 %1172
    %v1174 = vsel %vm1168, %v1173, %v1171
    %v1175 = vadd.f32 %v1169, %v1174
    %v1176 = vmax.f32 %v1175, 1e-24
    %v1177 = vrsqrt.pop %v1176
    %v1178 = vmul.f32 %v1177, %v1176
    %v1179 = vmul.f32 %v1178, %v1177
    %v1180 = vmul.f32 0.5, %v1179
    %v1181 = vsub.f32 1.5, %v1180
    %v1182 = vmul.f32 %v1177, %v1181
    %vm1183 = vweird.f32 %v1176
    %vm1184 = vweird.f32 %v1177
    %vm1185 = vmor %vm1183, %vm1184
    %v1186 = vsel %vm1185, %v1177, %v1182
    %v1187 = vmul.f32 %v1162, %v1186
    %vm1188 = vcmp.eq.s32.totalorder %v1166, 6
    %vm1189 = vcmp.eq.s32.totalorder %v1166, 7
    %v1190 = vsel %vm1189, 0.1, 0.0
    %v1191 = vsel %vm1188, 0.2, %v1190
    %v1192 = vtanh.pop %v1162
    %v1193 = vmul.f32 %v1192, %v1191
    %v1194 = vadd.f32 %v1193, 1.0
    %1195 = vrot.lane.b32.xlu0 %v1194, 1
    %v1196 = vpop.permute.xlu0 %1195
    %1197 = vrot.lane.b32.xlu0 %v1194, 127
    %v1198 = vpop.permute.xlu0 %1197
    %v1199 = vsel %vm1168, %v1198, %v1196
    %v1200 = vmul.f32 %v1194, %v1199
    %v1201 = vsel %vm1189, %v1200, %v1199
    %vm1202 = vcmp.lt.s32.totalorder %v1166, 6
    %vm1203 = vcmp.lt.s32.totalorder %v1166, 8
    %v1204 = vsel %vm1203, %v1201, 0.0
    %v1205 = vsel %vm1202, %v1187, %v1204
    %1206 = vst [vmem:[#allocation11] sm:$0xff] %v1205
    // Predicated region
    $region50: #{tpu_custom_call.1} parent=1 // pred_check
      _
    $region51: #{tpu_custom_call.1} parent=1 // pred_check_branch
      %1208 = sbr.rel (0) target = $region53
    $region52: #{tpu_custom_call.1} parent=1 // pred_region
      %1210 = vsyncadd [#allocation4], 0
      %s1212 = sshll.u32 [#allocation11], 4
      %s1213 = int_to_ptr.vmem [resolvable:$true] %s1212
      %s1214 = sshll.u32 %s7, 4
      %s1215 = int_to_ptr.hbm [resolvable:$true] %s1214
      %1217 = dma.vmem_to_hbm [thread:$0]  %s1213, 128, %s1215, [#allocation4]
    $region53: #{tpu_custom_call.1} parent=1 // pred_fallthru
      _
    // Predicated region
    $region54: #{tpu_custom_call.1} parent=1 // pred_check
      _
    $region55: #{tpu_custom_call.1} parent=1 // pred_check_branch
      %1219 = sbr.rel (0) target = $region57
    $region56: #{tpu_custom_call.1} parent=1 // pred_region
      %1221 = dma.done [#allocation4], 128
    $region57: #{tpu_custom_call.1} parent=1 // pred_fallthru
      _
    %1222 = vsyncpa [#allocation3], 1
    %1223 = vsyncpa [#allocation6], 1
    %1224 = vsyncpa [#allocation9], 1
    %1225 = vsyncpa [#allocation4], 1

</llo_original>
